<compile_context>
chip_gen: v6e
topology: v6e:2x2x1
jax: 0.10.0
libtpu: 0.0.40
codegen_flags: <defaults>
</compile_context>

<pallas_src>
import jax
import jax.numpy as jnp
from jax import lax
from jax.experimental import pallas as pl
from jax.experimental.pallas import tpu as pltpu

LANE = 128


def _round_up(a, b):
    return ((a + b - 1) // b) * b


def _to_rows(x):
    """Flatten to (rows, 128) lane-dense layout, padding only the last row."""
    flat = x.reshape(-1)
    rem = flat.shape[0] % LANE
    if rem:
        # zero pad -> padded elements fail the (inp>0)&(tar>0) data mask
        flat = jnp.pad(flat, (0, LANE - rem))
    return flat.reshape(-1, LANE)


def _make_l1_kernel(has_w, has_v, rows_valid, row_tile, steps_per_slice):
    def kernel(*refs):
        it = iter(refs)
        inp_ref = next(it)
        tar_ref = next(it)
        w_ref = next(it) if has_w else None
        v_ref = next(it) if has_v else None
        sum_ref = next(it)
        cnt_ref = next(it)

        c = pl.program_id(0)   # slice (TensorCore) axis -- "parallel"
        j = pl.program_id(1)   # reduction axis          -- "arbitrary"

        # Output blocks map to (c, 0) for every j, so they stay resident in
        # VMEM and act as per-slice accumulators; init at the first step.
        @pl.when(j == 0)
        def _():
            sum_ref[...] = jnp.zeros_like(sum_ref)
            cnt_ref[...] = jnp.zeros_like(cnt_ref)

        x = inp_ref[...].astype(jnp.float32)
        t = tar_ref[...].astype(jnp.float32)

        # mask = (tar > 0) & (inp > 0) [& (valid_mask nonzero)]
        mask = jnp.logical_and(t > 0.0, x > 0.0)
        if has_v:
            mask = jnp.logical_and(mask, v_ref[...] != 0)

        # Tail / overhang mask: rows at or beyond the true row count come from
        # partially (or fully) out-of-bounds blocks and hold garbage.
        block_idx = c * steps_per_slice + j
        row0 = block_idx * row_tile
        local_row = lax.broadcasted_iota(jnp.int32, (row_tile, LANE), 0)
        mask = jnp.logical_and(mask, (row0 + local_row) < rows_valid)

        diff = jnp.abs(x - t)
        if has_w:
            diff = diff * w_ref[...].astype(jnp.float32)

        # where() (not mask-multiply) so NaN garbage in overhang rows is safe.
        diff = jnp.where(mask, diff, 0.0)
        ones = jnp.where(mask, 1.0, 0.0)

        # Reduce (row_tile, 128) -> (8, 128): vreg-aligned reshape + pure VALU
        # adds; the expensive cross-lane reduce happens once, in JAX.
        sum_ref[...] += diff.reshape(row_tile // 8, 8, LANE).sum(axis=0)
        cnt_ref[...] += ones.reshape(row_tile // 8, 8, LANE).sum(axis=0)

    return kernel


def l1_loss(inp, tar, weight_mask=None, valid_mask=None, *,
            row_tile=1024, num_slices=2):
    """10 * mean(|inp - tar| * weight over mask), mask = (tar>0)&(inp>0)[&valid]."""
    assert inp.shape == tar.shape

    # bool refs are awkward on TPU; convert only the (optional, small) mask.
    if valid_mask is not None and jnp.issubdtype(valid_mask.dtype, jnp.bool_):
        valid_mask = valid_mask.astype(jnp.float32)

    has_w = weight_mask is not None
    has_v = valid_mask is not None
    streams = [inp, tar]
    if has_w:
        streams.append(weight_mask)
    if has_v:
        streams.append(valid_mask)

    n = int(inp.size)
    rows_arr = pl.cdiv(n, LANE)          # true number of data rows
    tiles = [_to_rows(s) for s in streams]

    # Tile sizing: big blocks (0.25-1 MiB per stream), multiple of 16 sublanes
    # (safe for both f32 and packed bf16), never larger than the array needs.
    row_tile_eff = min(int(row_tile), _round_up(rows_arr, 16))
    row_tile_eff = _round_up(max(row_tile_eff, 16), 16)
    row_tile_eff = min(row_tile_eff, 4096)   # keep 4 streams x 2 bufs << 64 MiB (v7x)

    num_blocks = pl.cdiv(rows_arr, row_tile_eff)
    nsl = max(1, min(int(num_slices), num_blocks))   # slice axis (2 TCs on v7x)
    steps = pl.cdiv(num_blocks, nsl)

    def in_map(c, j):
        # Clamp so overhang grid steps never issue an out-of-bounds DMA; their
        # contribution is zeroed in-kernel by the global-row mask.
        return (jnp.minimum(c * steps + j, num_blocks - 1), 0)

    in_specs = [pl.BlockSpec((row_tile_eff, LANE), in_map) for _ in tiles]
    out_spec = pl.BlockSpec((8, LANE), lambda c, j: (c, 0))

    kernel = _make_l1_kernel(has_w, has_v, rows_arr, row_tile_eff, steps)

    # Scoped VMEM: double-buffered input blocks + headroom, well under the
    # 64 MiB physical VMEM of v7x (and far under v5e/v6e's 128 MiB).
    block_bytes = sum(t.dtype.itemsize for t in tiles) * row_tile_eff * LANE
    vmem_limit = int(min(48 * 1024 * 1024,
                         max(32 * 1024 * 1024, 2 * block_bytes + (4 << 20))))

    psum, pcnt = pl.pallas_call(
        kernel,
        out_shape=(
            jax.ShapeDtypeStruct((nsl * 8, LANE), jnp.float32),
            jax.ShapeDtypeStruct((nsl * 8, LANE), jnp.float32),
        ),
        grid_spec=pltpu.PrefetchScalarGridSpec(
            num_scalar_prefetch=0,
            grid=(nsl, steps),
            in_specs=in_specs,
            out_specs=(out_spec, out_spec),
        ),
        compiler_params=pltpu.CompilerParams(
            dimension_semantics=("parallel", "arbitrary"),
            vmem_limit_bytes=vmem_limit),
    )(*tiles)

    # Final tiny reduction + masked mean in plain JAX.
    loss = jnp.sum(psum) / jnp.sum(pcnt)
    return 10.0 * loss


def _reference(inp, tar, weight_mask=None, valid_mask=None):
    inp = inp.astype(jnp.float32)
    tar = tar.astype(jnp.float32)
    mask = jnp.logical_and(tar > 0, inp > 0)
    if valid_mask is not None:
        mask = jnp.logical_and(mask, valid_mask != 0)
    maskf = mask.astype(jnp.float32)
    diff = jnp.abs(inp - tar)
    if weight_mask is not None:
        diff = diff * weight_mask.astype(jnp.float32)
    return 10.0 * jnp.sum(diff * maskf) / jnp.sum(maskf)


if __name__ == "__main__":
    key = jax.random.PRNGKey(0)
    k1, k2, k3, k4 = jax.random.split(key, 4)

    # NCHW like the PyTorch module would see (e.g. warped LF vs. image)
    N, C, H, W = 2, 4, 16, 16
    inp = jax.random.normal(k1, (N, C, H, W), dtype=jnp.float32) + 0.5
    tar = jax.random.normal(k2, (N, C, H, W), dtype=jnp.float32) + 0.5
    weight_mask = jax.random.uniform(k3, (N, C, H, W), dtype=jnp.float32)
    valid_mask = jax.random.uniform(k4, (N, C, H, W)) > 0.3

    # full path: weight + valid masks (4-input specialised kernel)
    out = jax.block_until_ready(l1_loss(inp, tar, weight_mask, valid_mask))
    ref = _reference(inp, tar, weight_mask, valid_mask)
    assert jnp.allclose(out, ref, rtol=1e-5, atol=1e-5), (out, ref)

    # no-mask path (2-input specialised kernel, half the HBM traffic)
    out2 = jax.block_until_ready(l1_loss(inp, tar))
    ref2 = _reference(inp, tar)
    assert jnp.allclose(out2, ref2, rtol=1e-5, atol=1e-5), (out2, ref2)

    # bf16 inputs stay bf16 in HBM, upcast inside the kernel
    inp_bf = inp.astype(jnp.bfloat16)
    tar_bf = tar.astype(jnp.bfloat16)
    out3 = jax.block_until_ready(l1_loss(inp_bf, tar_bf))
    ref3 = _reference(inp_bf, tar_bf)
    assert jnp.allclose(out3, ref3, rtol=1e-5, atol=1e-5), (out3, ref3)

    # size not a multiple of 128 -> exercises in-kernel tail masking
    k5, k6 = jax.random.split(k1)
    a = jax.random.normal(k5, (2, 3, 10, 10), dtype=jnp.float32) + 0.5
    b = jax.random.normal(k6, (2, 3, 10, 10), dtype=jnp.float32) + 0.5
    out4 = jax.block_until_ready(l1_loss(a, b))
    ref4 = _reference(a, b)
    assert jnp.allclose(out4, ref4, rtol=1e-5, atol=1e-5), (out4, ref4)

    print("KERNEL_OK")
</pallas_src>

<mosaic_0001>
module attributes {stable_mosaic.version = 11 : i64} {
  func.func @kernel(%arg0: i32, %arg1: i32, %arg2: memref<16x128xf32, #tpu.memory_space<vmem>>, %arg3: memref<16x128xf32, #tpu.memory_space<vmem>>, %arg4: memref<16x128xf32, #tpu.memory_space<vmem>>, %arg5: memref<16x128xf32, #tpu.memory_space<vmem>>, %arg6: memref<8x128xf32, #tpu.memory_space<vmem>>, %arg7: memref<8x128xf32, #tpu.memory_space<vmem>>) attributes {dimension_semantics = [#tpu.dimension_semantics<parallel>, #tpu.dimension_semantics<arbitrary>], iteration_bounds = array<i64: 1, 1>, scalar_prefetch = 0 : i64, scratch_operands = 0 : i64, tpu.core_type = #tpu.core_type<tc>, window_params = [{transform_indices = @transform_0, window_bounds = array<i64: 16, 128>}, {transform_indices = @transform_1, window_bounds = array<i64: 16, 128>}, {transform_indices = @transform_2, window_bounds = array<i64: 16, 128>}, {transform_indices = @transform_3, window_bounds = array<i64: 16, 128>}, {transform_indices = @transform_4, window_bounds = array<i64: 8, 128>}, {transform_indices = @transform_5, window_bounds = array<i64: 8, 128>}]} {
    %c0_i32 = arith.constant 0 : i32
    %0 = arith.cmpi eq, %arg1, %c0_i32 : i32
    %1 = arith.extui %0 : i1 to i32
    %c0_i32_0 = arith.constant 0 : i32
    %2 = arith.cmpi ne, %1, %c0_i32_0 : i32
    scf.if %2 {
      %cst_24 = arith.constant 0.000000e+00 : f32
      %42 = vector.broadcast %cst_24 : f32 to vector<8x128xf32>
      %c0_25 = arith.constant 0 : index
      %c0_26 = arith.constant 0 : index
      %43 = vector.load %arg6[%c0_25, %c0_26] : memref<8x128xf32, #tpu.memory_space<vmem>>, vector<8x128xf32>
      tpu.vector_store %arg6[%c0_25, %c0_26], %42 {strides = array<i32>} : memref<8x128xf32, #tpu.memory_space<vmem>>, vector<8x128xf32>,
      %cst_27 = arith.constant 0.000000e+00 : f32
      %44 = vector.broadcast %cst_27 : f32 to vector<8x128xf32>
      %c0_28 = arith.constant 0 : index
      %c0_29 = arith.constant 0 : index
      %45 = vector.load %arg7[%c0_28, %c0_29] : memref<8x128xf32, #tpu.memory_space<vmem>>, vector<8x128xf32>
      tpu.vector_store %arg7[%c0_28, %c0_29], %44 {strides = array<i32>} : memref<8x128xf32, #tpu.memory_space<vmem>>, vector<8x128xf32>,
    } else {
    }
    %c0 = arith.constant 0 : index
    %c0_1 = arith.constant 0 : index
    %3 = vector.load %arg2[%c0, %c0_1] : memref<16x128xf32, #tpu.memory_space<vmem>>, vector<16x128xf32>
    %c0_2 = arith.constant 0 : index
    %c0_3 = arith.constant 0 : index
    %4 = vector.load %arg3[%c0_2, %c0_3] : memref<16x128xf32, #tpu.memory_space<vmem>>, vector<16x128xf32>
    %cst = arith.constant 0.000000e+00 : f32
    %5 = vector.broadcast %cst : f32 to vector<16x128xf32>
    %6 = arith.cmpf ogt, %4, %5 : vector<16x128xf32>
    %cst_4 = arith.constant 0.000000e+00 : f32
    %7 = vector.broadcast %cst_4 : f32 to vector<16x128xf32>
    %8 = arith.cmpf ogt, %3, %7 : vector<16x128xf32>
    %9 = arith.andi %6, %8 : vector<16x128xi1>
    %c0_5 = arith.constant 0 : index
    %c0_6 = arith.constant 0 : index
    %10 = vector.load %arg5[%c0_5, %c0_6] : memref<16x128xf32, #tpu.memory_space<vmem>>, vector<16x128xf32>
    %cst_7 = arith.constant 0.000000e+00 : f32
    %11 = vector.broadcast %cst_7 : f32 to vector<16x128xf32>
    %12 = arith.cmpf one, %10, %11 : vector<16x128xf32>
    %13 = arith.andi %9, %12 : vector<16x128xi1>
    %c1_i32 = arith.constant 1 : i32
    %14 = arith.muli %arg0, %c1_i32 : i32
    %15 = arith.addi %14, %arg1 : i32
    %c16_i32 = arith.constant 16 : i32
    %16 = arith.muli %15, %c16_i32 : i32
    %17 = tpu.iota {dimensions = array<i32: 0>} : vector<16x128xi32>
    %18 = vector.broadcast %16 : i32 to vector<16x128xi32>
    %19 = arith.addi %18, %17 : vector<16x128xi32>
    %c16_i32_8 = arith.constant 16 : i32
    %20 = vector.broadcast %c16_i32_8 : i32 to vector<16x128xi32>
    %21 = arith.cmpi slt, %19, %20 : vector<16x128xi32>
    %22 = arith.andi %13, %21 : vector<16x128xi1>
    %23 = arith.subf %3, %4 : vector<16x128xf32>
    %24 = math.absf %23 : vector<16x128xf32>
    %c0_9 = arith.constant 0 : index
    %c0_10 = arith.constant 0 : index
    %25 = vector.load %arg4[%c0_9, %c0_10] : memref<16x128xf32, #tpu.memory_space<vmem>>, vector<16x128xf32>
    %26 = arith.mulf %24, %25 : vector<16x128xf32>
    %cst_11 = arith.constant 0.000000e+00 : f32
    %27 = vector.broadcast %cst_11 : f32 to vector<16x128xf32>
    %28 = arith.select %22, %26, %27 : vector<16x128xi1>, vector<16x128xf32>
    %cst_12 = arith.constant 1.000000e+00 : f32
    %cst_13 = arith.constant 0.000000e+00 : f32
    %29 = vector.broadcast %cst_12 : f32 to vector<16x128xf32>
    %30 = vector.broadcast %cst_13 : f32 to vector<16x128xf32>
    %31 = arith.select %22, %29, %30 : vector<16x128xi1>, vector<16x128xf32>
    %c0_14 = arith.constant 0 : index
    %c0_15 = arith.constant 0 : index
    %32 = vector.load %arg6[%c0_14, %c0_15] : memref<8x128xf32, #tpu.memory_space<vmem>>, vector<8x128xf32>
    %33 = vector.shape_cast %28 : vector<16x128xf32> to vector<2x8x128xf32>
    %cst_16 = arith.constant dense<0.000000e+00> : vector<8x128xf32>
    %34 = vector.multi_reduction <add>, %33, %cst_16 [0] : vector<2x8x128xf32> to vector<8x128xf32>
    %35 = arith.addf %32, %34 : vector<8x128xf32>
    %c0_17 = arith.constant 0 : index
    %c0_18 = arith.constant 0 : index
    %36 = vector.load %arg6[%c0_17, %c0_18] : memref<8x128xf32, #tpu.memory_space<vmem>>, vector<8x128xf32>
    tpu.vector_store %arg6[%c0_17, %c0_18], %35 {strides = array<i32>} : memref<8x128xf32, #tpu.memory_space<vmem>>, vector<8x128xf32>,
    %c0_19 = arith.constant 0 : index
    %c0_20 = arith.constant 0 : index
    %37 = vector.load %arg7[%c0_19, %c0_20] : memref<8x128xf32, #tpu.memory_space<vmem>>, vector<8x128xf32>
    %38 = vector.shape_cast %31 : vector<16x128xf32> to vector<2x8x128xf32>
    %cst_21 = arith.constant dense<0.000000e+00> : vector<8x128xf32>
    %39 = vector.multi_reduction <add>, %38, %cst_21 [0] : vector<2x8x128xf32> to vector<8x128xf32>
    %40 = arith.addf %37, %39 : vector<8x128xf32>
    %c0_22 = arith.constant 0 : index
    %c0_23 = arith.constant 0 : index
    %41 = vector.load %arg7[%c0_22, %c0_23] : memref<8x128xf32, #tpu.memory_space<vmem>>, vector<8x128xf32>
    tpu.vector_store %arg7[%c0_22, %c0_23], %40 {strides = array<i32>} : memref<8x128xf32, #tpu.memory_space<vmem>>, vector<8x128xf32>,
    return
  }
  func.func @transform_0(%arg0: i32, %arg1: i32) -> (i32, i32) {
    %c1_i32 = arith.constant 1 : i32
    %0 = arith.muli %arg0, %c1_i32 : i32
    %1 = arith.addi %0, %arg1 : i32
    %c0_i32 = arith.constant 0 : i32
    %2 = arith.minsi %1, %c0_i32 : i32
    %c0_i32_0 = arith.constant 0 : i32
    %c0_i32_1 = arith.constant 0 : i32
    return %2, %c0_i32_0 : i32, i32
  }
  func.func @transform_1(%arg0: i32, %arg1: i32) -> (i32, i32) {
    %c1_i32 = arith.constant 1 : i32
    %0 = arith.muli %arg0, %c1_i32 : i32
    %1 = arith.addi %0, %arg1 : i32
    %c0_i32 = arith.constant 0 : i32
    %2 = arith.minsi %1, %c0_i32 : i32
    %c0_i32_0 = arith.constant 0 : i32
    %c0_i32_1 = arith.constant 0 : i32
    return %2, %c0_i32_0 : i32, i32
  }
  func.func @transform_2(%arg0: i32, %arg1: i32) -> (i32, i32) {
    %c1_i32 = arith.constant 1 : i32
    %0 = arith.muli %arg0, %c1_i32 : i32
    %1 = arith.addi %0, %arg1 : i32
    %c0_i32 = arith.constant 0 : i32
    %2 = arith.minsi %1, %c0_i32 : i32
    %c0_i32_0 = arith.constant 0 : i32
    %c0_i32_1 = arith.constant 0 : i32
    return %2, %c0_i32_0 : i32, i32
  }
  func.func @transform_3(%arg0: i32, %arg1: i32) -> (i32, i32) {
    %c1_i32 = arith.constant 1 : i32
    %0 = arith.muli %arg0, %c1_i32 : i32
    %1 = arith.addi %0, %arg1 : i32
    %c0_i32 = arith.constant 0 : i32
    %2 = arith.minsi %1, %c0_i32 : i32
    %c0_i32_0 = arith.constant 0 : i32
    %c0_i32_1 = arith.constant 0 : i32
    return %2, %c0_i32_0 : i32, i32
  }
  func.func @transform_4(%arg0: i32, %arg1: i32) -> (i32, i32) {
    %c0_i32 = arith.constant 0 : i32
    %c0_i32_0 = arith.constant 0 : i32
    return %arg0, %c0_i32 : i32, i32
  }
  func.func @transform_5(%arg0: i32, %arg1: i32) -> (i32, i32) {
    %c0_i32 = arith.constant 0 : i32
    %c0_i32_0 = arith.constant 0 : i32
    return %arg0, %c0_i32 : i32, i32
  }
}

</mosaic_0001>

<llo_original>
// kernel: tpu_custom_call.1
$region0: #{tpu_custom_call.1}
  #allocation0 [shape = 'u32[]', space=smem, size = 0x4, offset = 0x4, fixed_abs, tag = 'smem constant byte address 0x4 - core index']
  #allocation1 [shape = 'u32[144,128]{1,0:T(1,128)}', space=vmem, size = 0x12000, scoped, tag = 'internal scratch']
  %s0 = inlined_call_operand.hbm [shape: f32[16,128], index: 0, kind: input, shape index: {}]
  %s1 = inlined_call_operand.hbm [shape: f32[16,128], index: 1, kind: input, shape index: {}]
  %s2 = inlined_call_operand.hbm [shape: f32[16,128], index: 2, kind: input, shape index: {}]
  %s3 = inlined_call_operand.hbm [shape: f32[16,128], index: 3, kind: input, shape index: {}]
  %s4 = inlined_call_operand.hbm [shape: f32[8,128], index: 4, kind: output, shape index: {0}]
  %s5 = inlined_call_operand.hbm [shape: f32[8,128], index: 5, kind: output, shape index: {1}]
  %6 = xla_tuple %s4, %s5
  %s7 = sld [smem:[#allocation0]]
  $region54: #{tpu_custom_call.1} parent=0
    _
  %s9 = ssub.s32 1, %s7
  %s10 = scalar_select 0, %s9, %s7
  $region1: #{tpu_custom_call.1} parent=0
    #allocation2 [shape = 'u8[8192]{0}', space=vmem, size = 0x2000, scoped, tag = 'input window, operand 0, single buffered']
    #allocation3 [shape = 's32[1]{0}', space=sflag, size = 0x4, scoped, tag = 'scoped memory for tpu_custom_call.1']
    #allocation4 [shape = 's32[1]{0}', space=sflag, size = 0x4, scoped, tag = 'scoped memory for tpu_custom_call.1']
    #allocation5 [shape = 'u8[8192]{0}', space=vmem, size = 0x2000, scoped, tag = 'input window, operand 1, single buffered']
    #allocation6 [shape = 's32[1]{0}', space=sflag, size = 0x4, scoped, tag = 'scoped memory for tpu_custom_call.1']
    #allocation7 [shape = 'u8[8192]{0}', space=vmem, size = 0x2000, scoped, tag = 'input window, operand 2, single buffered']
    #allocation8 [shape = 'u8[8192]{0}', space=vmem, size = 0x2000, scoped, tag = 'input window, operand 3, single buffered']
    #allocation9 [shape = 's32[1]{0}', space=sflag, size = 0x4, scoped, tag = 'scoped memory for tpu_custom_call.1']
    #allocation10 [shape = 'u8[4096]{0}', space=vmem, size = 0x1000, scoped, tag = 'output window, operand 0, single buffered']
    #allocation11 [shape = 'u8[4096]{0}', space=vmem, size = 0x1000, scoped, tag = 'output window, operand 1, single buffered']
    #allocation12 [shape = 's32[1]{0}', space=sflag, size = 0x4, scoped, tag = 'scoped memory for tpu_custom_call.1']
    %11 = vsyncpa [#allocation3], 0
    %12 = vsyncpa [#allocation6], 0
    %13 = vsyncpa [#allocation9], 0
    %14 = vsyncpa [#allocation4], 0
    %15 = vsyncpa [#allocation12], 0
    // Predicated region
    $region2: #{tpu_custom_call.1} parent=1 // pred_check
      _
    $region3: #{tpu_custom_call.1} parent=1 // pred_check_branch
      %17 = sbr.rel (0) target = $region5
    $region4: #{tpu_custom_call.1} parent=1 // pred_region
      %s18 = sadd.s32 0, 0
      %p19 = scmp.lt.s32.totalorder %s18, 0
      %s20 = scalar_select %p19, %s18, 0
      %s21 = smul.u32 2, %s20
      %s23 = ssub.s32 256, 256
      %24 = vsyncadd [#allocation3], %s23
      %s25 = smul.addr %s21, 128
      %s26 = scalar_lea.hbm %s0, %s25
      %s27 = sshll.u32 [#allocation2], 4
      %s28 = int_to_ptr.vmem [resolvable:$true] %s27
      %33 = dma.hbm_to_vmem [thread:$0]  %s26, 256, %s28, [#allocation3], 128, 128, 8
    $region5: #{tpu_custom_call.1} parent=1 // pred_fallthru
      _
    // Predicated region
    $region6: #{tpu_custom_call.1} parent=1 // pred_check
      _
    $region7: #{tpu_custom_call.1} parent=1 // pred_check_branch
      %35 = sbr.rel (0) target = $region9
    $region8: #{tpu_custom_call.1} parent=1 // pred_region
      %s36 = sadd.s32 0, 0
      %p37 = scmp.lt.s32.totalorder %s36, 0
      %s38 = scalar_select %p37, %s36, 0
      %s39 = smul.u32 2, %s38
      %s41 = ssub.s32 256, 256
      %42 = vsyncadd [#allocation6], %s41
      %s43 = smul.addr %s39, 128
      %s44 = scalar_lea.hbm %s1, %s43
      %s45 = sshll.u32 [#allocation5], 4
      %s46 = int_to_ptr.vmem [resolvable:$true] %s45
      %51 = dma.hbm_to_vmem [thread:$0]  %s44, 256, %s46, [#allocation6], 128, 128, 8
    $region9: #{tpu_custom_call.1} parent=1 // pred_fallthru
      _
    // Predicated region
    $region10: #{tpu_custom_call.1} parent=1 // pred_check
      _
    $region11: #{tpu_custom_call.1} parent=1 // pred_check_branch
      %53 = sbr.rel (0) target = $region13
    $region12: #{tpu_custom_call.1} parent=1 // pred_region
      %s54 = sadd.s32 0, 0
      %p55 = scmp.lt.s32.totalorder %s54, 0
      %s56 = scalar_select %p55, %s54, 0
      %s57 = smul.u32 2, %s56
      %s59 = ssub.s32 256, 256
      %60 = vsyncadd [#allocation6], %s59
      %s61 = smul.addr %s57, 128
      %s62 = scalar_lea.hbm %s2, %s61
      %s63 = sshll.u32 [#allocation7], 4
      %s64 = int_to_ptr.vmem [resolvable:$true] %s63
      %69 = dma.hbm_to_vmem [thread:$0]  %s62, 256, %s64, [#allocation6], 128, 128, 8
    $region13: #{tpu_custom_call.1} parent=1 // pred_fallthru
      _
    // Predicated region
    $region14: #{tpu_custom_call.1} parent=1 // pred_check
      _
    $region15: #{tpu_custom_call.1} parent=1 // pred_check_branch
      %71 = sbr.rel (0) target = $region17
    $region16: #{tpu_custom_call.1} parent=1 // pred_region
      %s72 = sadd.s32 0, 0
      %p73 = scmp.lt.s32.totalorder %s72, 0
      %s74 = scalar_select %p73, %s72, 0
      %s75 = smul.u32 2, %s74
      %s77 = ssub.s32 256, 256
      %78 = vsyncadd [#allocation9], %s77
      %s79 = smul.addr %s75, 128
      %s80 = scalar_lea.hbm %s3, %s79
      %s81 = sshll.u32 [#allocation8], 4
      %s82 = int_to_ptr.vmem [resolvable:$true] %s81
      %87 = dma.hbm_to_vmem [thread:$0]  %s80, 256, %s82, [#allocation9], 128, 128, 8
    $region17: #{tpu_custom_call.1} parent=1 // pred_fallthru
      _
    // Predicated region
    $region18: #{tpu_custom_call.1} parent=1 // pred_check
      _
    $region19: #{tpu_custom_call.1} parent=1 // pred_check_branch
      %89 = sbr.rel (0) target = $region21
    $region20: #{tpu_custom_call.1} parent=1 // pred_region
      %90 = dma.done [#allocation3], 256
    $region21: #{tpu_custom_call.1} parent=1 // pred_fallthru
      _
    // Predicated region
    $region22: #{tpu_custom_call.1} parent=1 // pred_check
      _
    $region23: #{tpu_custom_call.1} parent=1 // pred_check_branch
      %92 = sbr.rel (0) target = $region25
    $region24: #{tpu_custom_call.1} parent=1 // pred_region
      %93 = dma.done [#allocation6], 256
    $region25: #{tpu_custom_call.1} parent=1 // pred_fallthru
      _
    // Predicated region
    $region26: #{tpu_custom_call.1} parent=1 // pred_check
      _
    $region27: #{tpu_custom_call.1} parent=1 // pred_check_branch
      %95 = sbr.rel (0) target = $region29
    $region28: #{tpu_custom_call.1} parent=1 // pred_region
      %96 = dma.done [#allocation6], 256
    $region29: #{tpu_custom_call.1} parent=1 // pred_fallthru
      _
    // Predicated region
    $region30: #{tpu_custom_call.1} parent=1 // pred_check
      _
    $region31: #{tpu_custom_call.1} parent=1 // pred_check_branch
      %98 = sbr.rel (0) target = $region33
    $region32: #{tpu_custom_call.1} parent=1 // pred_region
      %99 = dma.done [#allocation9], 256
    $region33: #{tpu_custom_call.1} parent=1 // pred_fallthru
      _
    %s100 = sadd.s32 0, 0
    %p101 = scmp.lt.s32.totalorder %s100, 0
    %s102 = scalar_select %p101, %s100, 0
    %s103 = smul.u32 2, %s102
    %s104 = sadd.s32 0, 0
    %p105 = scmp.lt.s32.totalorder %s104, 0
    %s106 = scalar_select %p105, %s104, 0
    %s107 = smul.u32 2, %s106
    %s108 = sadd.s32 0, 0
    %p109 = scmp.lt.s32.totalorder %s108, 0
    %s110 = scalar_select %p109, %s108, 0
    %s111 = smul.u32 2, %s110
    %s112 = sadd.s32 0, 0
    %p113 = scmp.lt.s32.totalorder %s112, 0
    %s114 = scalar_select %p113, %s112, 0
    %s115 = smul.u32 2, %s114
    %p116 = scmp.eq.s32.totalorder 0, 0
    // Predicated region
    $region34: #{tpu_custom_call.1} parent=1 // pred_check
      %p117 = pneg %p116
    $region35: #{tpu_custom_call.1} parent=1 // pred_check_branch
      %119 = sbr.rel (%p117) target = $region37
    $region36: #{tpu_custom_call.1} parent=1 // pred_region
      %120 = vst [vmem:[#allocation10] sm:$0xff] 0.0
      %121 = vst [vmem:[#allocation11] sm:$0xff] 0.0
    $region37: #{tpu_custom_call.1} parent=1 // pred_fallthru
      _
    %v122 = vld [vmem:[#allocation2] sm:$0xff]
    %v123 = vld [vmem:[#allocation2 + $0x8] sm:$0xff]
    %v124 = vld [vmem:[#allocation5] sm:$0xff]
    %v125 = vld [vmem:[#allocation5 + $0x8] sm:$0xff]
    %vm126 = vcmp.gt.f32.partialorder %v124, 0.0
    %vm127 = vcmp.gt.f32.partialorder %v125, 0.0
    %vm128 = vcmp.gt.f32.partialorder %v122, 0.0
    %vm129 = vcmp.gt.f32.partialorder %v123, 0.0
    %vm130 = vmand %vm126, %vm128
    %vm131 = vmand %vm127, %vm129
    %v132 = vld [vmem:[#allocation8] sm:$0xff]
    %v133 = vld [vmem:[#allocation8 + $0x8] sm:$0xff]
    %vm134 = vcmp.ne.f32.partialorder %v132, 0.0
    %vm135 = vcmp.ne.f32.partialorder %v133, 0.0
    %vm136 = vmand %vm130, %vm134
    %vm137 = vmand %vm131, %vm135
    %s138 = sadd.s32 0, 0
    %s139 = smul.u32 %s138, 16
    %v140 = vlaneseq
    %v141 = vshrl.u32 %v140, 7
    %v142 = vadd.s32 %v141, 8
    %v143 = vstv %s139
    %v144 = vadd.s32 %v143, %v141
    %v145 = vadd.s32 %v143, %v142
    %vm146 = vcmp.lt.s32.totalorder %v144, 16
    %vm147 = vcmp.lt.s32.totalorder %v145, 16
    %vm148 = vmand %vm136, %vm146
    %vm149 = vmand %vm137, %vm147
    %v150 = vsub.f32 %v122, %v124
    %v151 = vsub.f32 %v123, %v125
    %v152 = vand.u32 2147483647, %v150
    %v153 = vand.u32 2147483647, %v151
    %v154 = vld [vmem:[#allocation7] sm:$0xff]
    %v155 = vld [vmem:[#allocation7 + $0x8] sm:$0xff]
    %v156 = vmul.f32 %v152, %v154
    %v157 = vmul.f32 %v153, %v155
    %v158 = vsel %vm148, %v156, 0.0
    %v159 = vsel %vm149, %v157, 0.0
    %v160 = vsel %vm148, 1.0, 0.0
    %v161 = vsel %vm149, 1.0, 0.0
    %v162 = vld [vmem:[#allocation10] sm:$0xff]
    %v163 = vadd.f32 %v158, %v159
    %v164 = vadd.f32 %v162, %v163
    %165 = vst [vmem:[#allocation10] sm:$0xff] %v164
    %v166 = vld [vmem:[#allocation11] sm:$0xff]
    %v167 = vadd.f32 %v160, %v161
    %v168 = vadd.f32 %v166, %v167
    %169 = vst [vmem:[#allocation11] sm:$0xff] %v168
    // Predicated region
    $region38: #{tpu_custom_call.1} parent=1 // pred_check
      _
    $region39: #{tpu_custom_call.1} parent=1 // pred_check_branch
      %171 = sbr.rel (0) target = $region41
    $region40: #{tpu_custom_call.1} parent=1 // pred_region
      %s173 = ssub.s32 128, 128
      %174 = vsyncadd [#allocation4], %s173
      %s176 = sshll.u32 [#allocation10], 4
      %s177 = int_to_ptr.vmem [resolvable:$true] %s176
      %179 = dma.vmem_to_hbm [thread:$0]  %s177, 128, %s4, [#allocation4]
    $region41: #{tpu_custom_call.1} parent=1 // pred_fallthru
      _
    // Predicated region
    $region42: #{tpu_custom_call.1} parent=1 // pred_check
      _
    $region43: #{tpu_custom_call.1} parent=1 // pred_check_branch
      %181 = sbr.rel (0) target = $region45
    $region44: #{tpu_custom_call.1} parent=1 // pred_region
      %s183 = ssub.s32 128, 128
      %184 = vsyncadd [#allocation12], %s183
      %s186 = sshll.u32 [#allocation11], 4
      %s187 = int_to_ptr.vmem [resolvable:$true] %s186
      %189 = dma.vmem_to_hbm [thread:$0]  %s187, 128, %s5, [#allocation12]
    $region45: #{tpu_custom_call.1} parent=1 // pred_fallthru
      _
    // Predicated region
    $region46: #{tpu_custom_call.1} parent=1 // pred_check
      _
    $region47: #{tpu_custom_call.1} parent=1 // pred_check_branch
      %191 = sbr.rel (0) target = $region49
    $region48: #{tpu_custom_call.1} parent=1 // pred_region
      %192 = dma.done [#allocation4], 128
    $region49: #{tpu_custom_call.1} parent=1 // pred_fallthru
      _
    // Predicated region
    $region50: #{tpu_custom_call.1} parent=1 // pred_check
      _
    $region51: #{tpu_custom_call.1} parent=1 // pred_check_branch
      %194 = sbr.rel (0) target = $region53
    $region52: #{tpu_custom_call.1} parent=1 // pred_region
      %195 = dma.done [#allocation12], 128
    $region53: #{tpu_custom_call.1} parent=1 // pred_fallthru
      _
    %196 = vsyncpa [#allocation3], 1
    %197 = vsyncpa [#allocation6], 1
    %198 = vsyncpa [#allocation9], 1
    %199 = vsyncpa [#allocation4], 1
    %200 = vsyncpa [#allocation12], 1

</llo_original>
